<compile_context>
chip_gen: v7x
topology: tpu7x:2x2x1
jax: 0.10.0
libtpu: 0.0.40
codegen_flags: <defaults>
</compile_context>

<pallas_src>
import jax
import jax.numpy as jnp
from jax.experimental import pallas as pl
from jax.experimental.pallas import tpu as pltpu

FC1_DIMS = 256
FC2_DIMS = 256
LANE = 128       # TPU lane width: output last dim padded to a multiple of this
ROW_GRAN = 16    # batch-tile row granule (multiple of 8 sublanes; 16 is bf16-tile safe)
SUBLANE = 8


def _round_up(n, m):
    return ((n + m - 1) // m) * m


def _cdiv(a, b):
    return (a + b - 1) // b


# ----------------------------------------------------------------------------------
# Kernel: one batch tile per grid step; weights/biases VMEM-resident (constant maps).
# ----------------------------------------------------------------------------------
def _mlp_kernel(x_ref, w1_ref, b1_ref, w2_ref, b2_ref, w3_ref, b3_ref, o_ref):
    x = x_ref[...].astype(jnp.bfloat16)
    h1 = jnp.dot(x, w1_ref[...], preferred_element_type=jnp.float32) + b1_ref[...]
    h1 = jnp.maximum(h1, 0.0)
    h2 = jnp.dot(h1.astype(jnp.bfloat16), w2_ref[...],
                 preferred_element_type=jnp.float32) + b2_ref[...]
    h2 = jnp.maximum(h2, 0.0)
    out = jnp.dot(h2.astype(jnp.bfloat16), w3_ref[...],
                  preferred_element_type=jnp.float32) + b3_ref[...]
    o_ref[...] = out.astype(o_ref.dtype)   # bf16 store, lane-dense (n_out_p % 128 == 0)


# ----------------------------------------------------------------------------------
# One-time parameter preparation (hoisted out of the forward path).
# ----------------------------------------------------------------------------------
def prepare_params(params):
    """Cast weights to bf16, reshape biases, and lane-pad layer 3 — once, not per call."""
    w1, b1 = params["w1"], params["b1"]
    w2, b2 = params["w2"], params["b2"]
    w3, b3 = params["w3"], params["b3"]
    obs_dim = int(w1.shape[0])
    n_actions = int(w3.shape[1])
    n_out_p = _round_up(n_actions, LANE)

    w3b = jnp.zeros((FC2_DIMS, n_out_p), jnp.bfloat16).at[:, :n_actions].set(
        w3.astype(jnp.bfloat16))
    b3p = jnp.zeros((1, n_out_p), jnp.float32).at[:, :n_actions].set(
        jnp.asarray(b3, jnp.float32).reshape(1, n_actions))

    return {
        "w1": w1.astype(jnp.bfloat16),
        "b1": jnp.asarray(b1, jnp.float32).reshape(1, FC1_DIMS),
        "w2": w2.astype(jnp.bfloat16),
        "b2": jnp.asarray(b2, jnp.float32).reshape(1, FC2_DIMS),
        "w3": w3b,
        "b3": b3p,
        "obs_dim": obs_dim,
        "n_actions": n_actions,
        "n_out_p": n_out_p,
    }


def _vmem_limit_bytes(tb, obs_dim, n_out_p):
    """Rough per-TC VMEM footprint of one pipelined step + headroom."""
    obs_l = _round_up(obs_dim, LANE)                       # lane-padded input row
    x_io = 2 * tb * obs_l * 4                              # double-buffered f32 x tile
    out_io = 2 * tb * n_out_p * 2                          # double-buffered bf16 out tile
    interm = tb * (FC1_DIMS + FC2_DIMS) * (4 + 2)          # h1/h2 f32 + bf16 copies
    interm += tb * (obs_l * 2 + n_out_p * 4)               # x bf16 copy + layer-3 f32 acc
    weights = 2 * ((obs_l * FC1_DIMS + FC1_DIMS * FC2_DIMS + FC2_DIMS * n_out_p) * 2
                   + (FC1_DIMS + FC2_DIMS + n_out_p) * 4 * SUBLANE)
    est = x_io + out_io + interm + weights
    # 25% + 4 MiB headroom, clamped to stay under v7x's 64 MiB physical VMEM.
    return int(min(max(est * 5 // 4 + (4 << 20), 16 << 20), 48 << 20))


# ----------------------------------------------------------------------------------
# Forward pass.
# ----------------------------------------------------------------------------------
def network_forward(x, prep, *, tb_max=4096, min_tiles=2, out_dtype=jnp.float32):
    """Forward pass of Network as a batch-tiled fused Pallas kernel.

    x:    (batch, obs_dim) float32
    prep: output of prepare_params()
    tb_max:    max batch-tile rows per grid step.
    min_tiles: minimum number of grid steps (2 lets v7x use both TensorCores).
    returns: (batch, n_actions) in out_dtype.
    """
    batch, obs_dim = x.shape
    assert obs_dim == prep["obs_dim"], "x feature dim does not match prepared params"
    n_actions, n_out_p = prep["n_actions"], prep["n_out_p"]

    # ---- near-even batch tiling (keeps x padding to at most a few row-granules) ----
    batch_p_min = _round_up(max(batch, 1), ROW_GRAN)
    n_tiles = max(_cdiv(batch_p_min, max(_round_up(tb_max, ROW_GRAN), ROW_GRAN)),
                  max(int(min_tiles), 1))
    tb = _round_up(_cdiv(batch_p_min, n_tiles), ROW_GRAN)
    batch_p = tb * n_tiles
    x_p = x if batch_p == batch else jnp.pad(x, ((0, batch_p - batch), (0, 0)))

    flops = 2 * batch_p * (obs_dim * FC1_DIMS + FC1_DIMS * FC2_DIMS
                           + FC2_DIMS * n_out_p)
    bytes_accessed = (batch_p * obs_dim * 4                       # x read (f32)
                      + batch_p * n_out_p * 2                     # out write (bf16)
                      + (obs_dim * FC1_DIMS + FC1_DIMS * FC2_DIMS
                         + FC2_DIMS * n_out_p) * 2                # bf16 weights
                      + (FC1_DIMS + FC2_DIMS + n_out_p) * 4)      # f32 biases

    out_p = pl.pallas_call(
        _mlp_kernel,
        out_shape=jax.ShapeDtypeStruct((batch_p, n_out_p), jnp.bfloat16),
        grid_spec=pltpu.PrefetchScalarGridSpec(
            num_scalar_prefetch=0,
            grid=(n_tiles,),
            in_specs=[
                pl.BlockSpec((tb, obs_dim), lambda i: (i, 0)),         # x tile
                pl.BlockSpec((obs_dim, FC1_DIMS), lambda i: (0, 0)),   # w1 (resident)
                pl.BlockSpec((1, FC1_DIMS), lambda i: (0, 0)),         # b1
                pl.BlockSpec((FC1_DIMS, FC2_DIMS), lambda i: (0, 0)),  # w2
                pl.BlockSpec((1, FC2_DIMS), lambda i: (0, 0)),         # b2
                pl.BlockSpec((FC2_DIMS, n_out_p), lambda i: (0, 0)),   # w3 (padded)
                pl.BlockSpec((1, n_out_p), lambda i: (0, 0)),          # b3 (padded)
            ],
            out_specs=pl.BlockSpec((tb, n_out_p), lambda i: (i, 0)),
        ),
        compiler_params=pltpu.CompilerParams(
            dimension_semantics=("parallel",),
            vmem_limit_bytes=_vmem_limit_bytes(tb, obs_dim, n_out_p)),
        cost_estimate=pl.CostEstimate(
            flops=flops, transcendentals=0, bytes_accessed=bytes_accessed),
    )(x_p, prep["w1"], prep["b1"], prep["w2"], prep["b2"], prep["w3"], prep["b3"])

    # Slice away batch padding and the zero-padded action lanes before any argmax.
    return out_p[:batch, :n_actions].astype(out_dtype)


# ----------------------------------------------------------------------------------
# Init + references + self-test.
# ----------------------------------------------------------------------------------
def init_params(key, obs_dim, n_actions):
    """Deterministic init mimicking PyTorch nn.Linear default U(-1/sqrt(fan_in), +)."""
    def linear_init(k, fan_in, fan_out):
        kw, kb = jax.random.split(k)
        bound = 1.0 / jnp.sqrt(float(fan_in))
        w = jax.random.uniform(kw, (fan_in, fan_out), jnp.float32, -bound, bound)
        b = jax.random.uniform(kb, (1, fan_out), jnp.float32, -bound, bound)
        return w, b

    k1, k2, k3 = jax.random.split(key, 3)
    w1, b1 = linear_init(k1, obs_dim, FC1_DIMS)
    w2, b2 = linear_init(k2, FC1_DIMS, FC2_DIMS)
    w3, b3 = linear_init(k3, FC2_DIMS, n_actions)
    return {"w1": w1, "b1": b1, "w2": w2, "b2": b2, "w3": w3, "b3": b3}


def _ref_forward_f32(x, params):
    h = jnp.maximum(x @ params["w1"] + params["b1"], 0.0)
    h = jnp.maximum(h @ params["w2"] + params["b2"], 0.0)
    return h @ params["w3"] + params["b3"]


def _ref_forward_bf16(x, params):
    # Same arithmetic as the kernel: bf16 operands, f32 accumulation, bf16 output.
    w1 = params["w1"].astype(jnp.bfloat16)
    w2 = params["w2"].astype(jnp.bfloat16)
    w3 = params["w3"].astype(jnp.bfloat16)
    h = jnp.dot(x.astype(jnp.bfloat16), w1,
                preferred_element_type=jnp.float32) + params["b1"]
    h = jnp.maximum(h, 0.0)
    h = jnp.dot(h.astype(jnp.bfloat16), w2,
                preferred_element_type=jnp.float32) + params["b2"]
    h = jnp.maximum(h, 0.0)
    out = jnp.dot(h.astype(jnp.bfloat16), w3,
                  preferred_element_type=jnp.float32) + params["b3"]
    return out.astype(jnp.bfloat16).astype(jnp.float32)


if __name__ == "__main__":
    key = jax.random.PRNGKey(0)
    k_params, k_x1, k_x2 = jax.random.split(key, 3)

    # Env-like shapes: LunarLander-style obs_dim=8, n_actions=4.
    obs_dim, n_actions = 8, 4
    params = init_params(k_params, obs_dim, n_actions)
    prep = prepare_params(params)   # one-time weight cast/pad (hoisted out of forward)

    # Test 1: tiny batch -> min_tiles=2 splits it across two grid steps (v7x-friendly).
    x1 = jax.random.normal(k_x1, (2, obs_dim), jnp.float32)
    out1 = jax.block_until_ready(network_forward(x1, prep))
    assert out1.shape == (2, n_actions)
    assert out1.dtype == jnp.float32
    assert jnp.allclose(out1, _ref_forward_bf16(x1, params), atol=5e-3, rtol=5e-3)
    assert jnp.allclose(out1, _ref_forward_f32(x1, params), atol=5e-2, rtol=5e-2)

    # Test 2: batch not a multiple of the tile -> exercises grid > 1 and near-even
    # tiling with a small row pad.
    x2 = jax.random.normal(k_x2, (50, obs_dim), jnp.float32)
    out2 = jax.block_until_ready(network_forward(x2, prep, tb_max=16))
    assert out2.shape == (50, n_actions)
    assert jnp.allclose(out2, _ref_forward_bf16(x2, params), atol=5e-3, rtol=5e-3)
    assert jnp.allclose(out2, _ref_forward_f32(x2, params), atol=5e-2, rtol=5e-2)

    print("KERNEL_OK")
</pallas_src>

<mosaic_0001>
module attributes {stable_mosaic.version = 11 : i64} {
  func.func @_mlp_kernel(%arg0: i32, %arg1: memref<16x8xf32, #tpu.memory_space<vmem>>, %arg2: memref<8x256xbf16, #tpu.memory_space<vmem>>, %arg3: memref<1x256xf32, #tpu.memory_space<vmem>>, %arg4: memref<256x256xbf16, #tpu.memory_space<vmem>>, %arg5: memref<1x256xf32, #tpu.memory_space<vmem>>, %arg6: memref<256x128xbf16, #tpu.memory_space<vmem>>, %arg7: memref<1x128xf32, #tpu.memory_space<vmem>>, %arg8: memref<16x128xbf16, #tpu.memory_space<vmem>>) attributes {dimension_semantics = [#tpu.dimension_semantics<parallel>], iteration_bounds = array<i64: 2>, scalar_prefetch = 0 : i64, scratch_operands = 0 : i64, tpu.core_type = #tpu.core_type<tc>, window_params = [{transform_indices = @transform_0, window_bounds = array<i64: 16, 8>}, {pipeline_mode = #tpu.pipeline_mode<synchronous>, transform_indices = @transform_1, window_bounds = array<i64: 8, 256>}, {pipeline_mode = #tpu.pipeline_mode<synchronous>, transform_indices = @transform_2, window_bounds = array<i64: 1, 256>}, {pipeline_mode = #tpu.pipeline_mode<synchronous>, transform_indices = @transform_3, window_bounds = array<i64: 256, 256>}, {pipeline_mode = #tpu.pipeline_mode<synchronous>, transform_indices = @transform_4, window_bounds = array<i64: 1, 256>}, {pipeline_mode = #tpu.pipeline_mode<synchronous>, transform_indices = @transform_5, window_bounds = array<i64: 256, 128>}, {pipeline_mode = #tpu.pipeline_mode<synchronous>, transform_indices = @transform_6, window_bounds = array<i64: 1, 128>}, {transform_indices = @transform_7, window_bounds = array<i64: 16, 128>}]} {
    %c0 = arith.constant 0 : index
    %c0_0 = arith.constant 0 : index
    %0 = vector.load %arg1[%c0, %c0_0] : memref<16x8xf32, #tpu.memory_space<vmem>>, vector<16x8xf32>
    %1 = arith.truncf %0 : vector<16x8xf32> to vector<16x8xbf16>
    %c0_1 = arith.constant 0 : index
    %c0_2 = arith.constant 0 : index
    %2 = vector.load %arg2[%c0_1, %c0_2] : memref<8x256xbf16, #tpu.memory_space<vmem>>, vector<8x256xbf16>
    %cst = arith.constant dense<0.000000e+00> : vector<16x256xf32>
    %3 = tpu.matmul %1, %2, %cst {dimension_numbers = #tpu.dot_dimension_numbers<[1], [0], [0], [1], [0, 0, 1, 1], [], []>} : vector<16x8xbf16>, vector<8x256xbf16>, vector<16x256xf32> -> vector<16x256xf32>
    %c0_3 = arith.constant 0 : index
    %c0_4 = arith.constant 0 : index
    %4 = vector.load %arg3[%c0_3, %c0_4] : memref<1x256xf32, #tpu.memory_space<vmem>>, vector<1x256xf32>
    %5 = vector.broadcast %4 : vector<1x256xf32> to vector<16x256xf32>
    %6 = arith.addf %3, %5 : vector<16x256xf32>
    %cst_5 = arith.constant 0.000000e+00 : f32
    %7 = vector.broadcast %cst_5 : f32 to vector<16x256xf32>
    %8 = arith.maximumf %6, %7 : vector<16x256xf32>
    %9 = arith.truncf %8 : vector<16x256xf32> to vector<16x256xbf16>
    %c0_6 = arith.constant 0 : index
    %c0_7 = arith.constant 0 : index
    %10 = vector.load %arg4[%c0_6, %c0_7] : memref<256x256xbf16, #tpu.memory_space<vmem>>, vector<256x256xbf16>
    %cst_8 = arith.constant dense<0.000000e+00> : vector<16x256xf32>
    %11 = tpu.matmul %9, %10, %cst_8 {dimension_numbers = #tpu.dot_dimension_numbers<[1], [0], [0], [1], [0, 0, 1, 1], [], []>} : vector<16x256xbf16>, vector<256x256xbf16>, vector<16x256xf32> -> vector<16x256xf32>
    %c0_9 = arith.constant 0 : index
    %c0_10 = arith.constant 0 : index
    %12 = vector.load %arg5[%c0_9, %c0_10] : memref<1x256xf32, #tpu.memory_space<vmem>>, vector<1x256xf32>
    %13 = vector.broadcast %12 : vector<1x256xf32> to vector<16x256xf32>
    %14 = arith.addf %11, %13 : vector<16x256xf32>
    %cst_11 = arith.constant 0.000000e+00 : f32
    %15 = vector.broadcast %cst_11 : f32 to vector<16x256xf32>
    %16 = arith.maximumf %14, %15 : vector<16x256xf32>
    %17 = arith.truncf %16 : vector<16x256xf32> to vector<16x256xbf16>
    %c0_12 = arith.constant 0 : index
    %c0_13 = arith.constant 0 : index
    %18 = vector.load %arg6[%c0_12, %c0_13] : memref<256x128xbf16, #tpu.memory_space<vmem>>, vector<256x128xbf16>
    %cst_14 = arith.constant dense<0.000000e+00> : vector<16x128xf32>
    %19 = tpu.matmul %17, %18, %cst_14 {dimension_numbers = #tpu.dot_dimension_numbers<[1], [0], [0], [1], [0, 0, 1, 1], [], []>} : vector<16x256xbf16>, vector<256x128xbf16>, vector<16x128xf32> -> vector<16x128xf32>
    %c0_15 = arith.constant 0 : index
    %c0_16 = arith.constant 0 : index
    %20 = vector.load %arg7[%c0_15, %c0_16] : memref<1x128xf32, #tpu.memory_space<vmem>>, vector<1x128xf32>
    %21 = vector.broadcast %20 : vector<1x128xf32> to vector<16x128xf32>
    %22 = arith.addf %19, %21 : vector<16x128xf32>
    %23 = arith.truncf %22 : vector<16x128xf32> to vector<16x128xbf16>
    %c0_17 = arith.constant 0 : index
    %c0_18 = arith.constant 0 : index
    %24 = vector.load %arg8[%c0_17, %c0_18] : memref<16x128xbf16, #tpu.memory_space<vmem>>, vector<16x128xbf16>
    tpu.vector_store %arg8[%c0_17, %c0_18], %23 {strides = array<i32>} : memref<16x128xbf16, #tpu.memory_space<vmem>>, vector<16x128xbf16>,
    return
  }
  func.func @transform_0(%arg0: i32) -> (i32, i32) {
    %c0_i32 = arith.constant 0 : i32
    %c0_i32_0 = arith.constant 0 : i32
    return %arg0, %c0_i32 : i32, i32
  }
  func.func @transform_1(%arg0: i32) -> (i32, i32) {
    %c0_i32 = arith.constant 0 : i32
    %c0_i32_0 = arith.constant 0 : i32
    %c0_i32_1 = arith.constant 0 : i32
    return %c0_i32, %c0_i32_0 : i32, i32
  }
  func.func @transform_2(%arg0: i32) -> (i32, i32) {
    %c0_i32 = arith.constant 0 : i32
    %c0_i32_0 = arith.constant 0 : i32
    %c0_i32_1 = arith.constant 0 : i32
    return %c0_i32, %c0_i32_0 : i32, i32
  }
  func.func @transform_3(%arg0: i32) -> (i32, i32) {
    %c0_i32 = arith.constant 0 : i32
    %c0_i32_0 = arith.constant 0 : i32
    %c0_i32_1 = arith.constant 0 : i32
    return %c0_i32, %c0_i32_0 : i32, i32
  }
  func.func @transform_4(%arg0: i32) -> (i32, i32) {
    %c0_i32 = arith.constant 0 : i32
    %c0_i32_0 = arith.constant 0 : i32
    %c0_i32_1 = arith.constant 0 : i32
    return %c0_i32, %c0_i32_0 : i32, i32
  }
  func.func @transform_5(%arg0: i32) -> (i32, i32) {
    %c0_i32 = arith.constant 0 : i32
    %c0_i32_0 = arith.constant 0 : i32
    %c0_i32_1 = arith.constant 0 : i32
    return %c0_i32, %c0_i32_0 : i32, i32
  }
  func.func @transform_6(%arg0: i32) -> (i32, i32) {
    %c0_i32 = arith.constant 0 : i32
    %c0_i32_0 = arith.constant 0 : i32
    %c0_i32_1 = arith.constant 0 : i32
    return %c0_i32, %c0_i32_0 : i32, i32
  }
  func.func @transform_7(%arg0: i32) -> (i32, i32) {
    %c0_i32 = arith.constant 0 : i32
    %c0_i32_0 = arith.constant 0 : i32
    return %arg0, %c0_i32 : i32, i32
  }
}

</mosaic_0001>

<llo_original>
// kernel: tpu_custom_call.1
$region0: #{tpu_custom_call.1}
  #allocation0 [shape = 'u32[]', space=smem, size = 0x4, offset = 0x4, fixed_abs, tag = 'smem constant byte address 0x4 - core index']
  #allocation1 [shape = 'u32[144,128]{1,0:T(1,128)}', space=vmem, size = 0x12000, scoped, tag = 'internal scratch']
  %s0 = inlined_call_operand.vmem [shape: f32[32,8], index: 0, kind: input, shape index: {}]
  %s1 = inlined_call_operand.vmem [shape: bf16[8,256], index: 1, kind: input, shape index: {}]
  %s2 = inlined_call_operand.vmem [shape: f32[1,256], index: 2, kind: input, shape index: {}]
  %s3 = inlined_call_operand.hbm [shape: bf16[256,256], index: 3, kind: input, shape index: {}]
  %s4 = inlined_call_operand.vmem [shape: f32[1,256], index: 4, kind: input, shape index: {}]
  %s5 = inlined_call_operand.hbm [shape: bf16[256,128], index: 5, kind: input, shape index: {}]
  %s6 = inlined_call_operand.vmem [shape: f32[1,128], index: 6, kind: input, shape index: {}]
  %s7 = inlined_call_operand.hbm [shape: bf16[32,128], index: 7, kind: output, shape index: {}]
  %s8 = sld [smem:[#allocation0]]
  $region69: #{tpu_custom_call.1} parent=0
    _
  %s10 = ssub.s32 1, %s8
  %s11 = scalar_select 0, %s10, %s8
  $region1: #{tpu_custom_call.1} parent=0
    #allocation2 [shape = 'u8[131072]{0}', space=vmem, size = 0x20000, scoped, tag = 'input window, operand 3, single buffered']
    #allocation3 [shape = 's32[2]{0}', space=sflag, size = 0x8, scoped, tag = 'scoped memory for tpu_custom_call.1']
    #allocation4 [shape = 's32[2]{0}', space=sflag, size = 0x8, scoped, tag = 'scoped memory for tpu_custom_call.1']
    #allocation5 [shape = 'u8[65536]{0}', space=vmem, size = 0x10000, scoped, tag = 'input window, operand 5, single buffered']
    #allocation6 [shape = 's32[1]{0}', space=sflag, size = 0x4, scoped, tag = 'scoped memory for tpu_custom_call.1']
    #allocation7 [shape = 'u8[8192]{0}', space=vmem, size = 0x2000, scoped, tag = 'output window, operand 0']
    %12 = vsyncpa [#allocation3], 0
    %13 = vsyncpa [#allocation6], 0
    %14 = vsyncpa [#allocation4], 0
    %s15 = scalar_lea.sflag [#allocation4], 1
    %16 = vsyncpa %s15, 0
    loop: start=0, step=1, limit=4
    $region2: #{tpu_custom_call.1} parent=1 // loop_pre_header
      _
    $region3: #{tpu_custom_call.1} parent=1 // loop_header
      %s18 = sphi 0, %s22
      %p19 = scmp.ge.s32.totalorder %s18, 4
      %s28 = sphi 0, %s30
      %s31 = sphi 0, %s28
      %s32 = sphi 0, %s31
      %s48 = sphi 0, %s32
      %s52 = sphi 0, %s52
      %s54 = sphi 0, %s52
      %s55 = sphi 0, %s54
      %s69 = sphi 0, %s55
      %s73 = sphi 0, %s73
      %s75 = sphi 0, %s73
      %s76 = sphi 0, %s75
      %s90 = sphi 0, %s76
      %s94 = sphi 0, %s94
      %s96 = sphi 0, %s94
      %s97 = sphi 0, %s96
      %s111 = sphi 0, %s97
      %s115 = sphi 0, %s115
      %s117 = sphi 0, %s115
      %s118 = sphi 0, %s117
      %s132 = sphi 0, %s118
      %s136 = sphi 0, %s136
      %s138 = sphi 0, %s136
      %s139 = sphi 0, %s138
      %s153 = sphi 0, %s139
      %s157 = sphi 0, %s157
      %s159 = sphi 0, %s157
      %s160 = sphi 0, %s159
      %s174 = sphi 0, %s160
      %s180 = sphi 0, %s182
      %s183 = sphi 0, %s180
      %s184 = sphi 0, %s183
      %s200 = sphi 0, %s184
    $region4: #{tpu_custom_call.1} parent=1 // loop_header_branch
      %21 = sbr.rel (%p19) target = $region8
    $region5: #{tpu_custom_call.1} parent=1 // loop_body
      %s23 = ssub.s32 %s18, 1
      %s24 = ssub.s32 %s18, 2
      %s25 = sadd.s32 %s18, 1
      %s26 = ssub.s32 %s18, %s25
      %p27 = scmp.eq.s32.totalorder %s26, 0
      %s29 = sadd.s32 %s28, 1
      %s30 = scalar_select %p27, %s28, %s29
      %p33 = pneg %p27
      %p34 = scmp.eq.s32.totalorder %s18, 1
      %p35 = por %p33, %p34
      %p36 = scmp.ne.s32.totalorder %s28, %s31
      %p37 = scmp.eq.s32.totalorder %s18, 0
      %p38 = por %p36, %p37
      %p39 = scmp.ne.s32.totalorder %s28, %s31
      %p40 = scmp.eq.s32.totalorder %s23, 1
      %p41 = por %p39, %p40
      %p42 = scmp.ne.s32.totalorder %s31, %s32
      %p43 = scmp.eq.s32.totalorder %s23, 0
      %p44 = por %p42, %p43
      %p45 = scmp.ne.s32.totalorder %s31, %s32
      %p46 = scmp.eq.s32.totalorder %s24, 1
      %p47 = por %p45, %p46
      %p49 = scmp.ne.s32.totalorder %s32, %s48
      %p50 = scmp.eq.s32.totalorder %s24, 0
      %p51 = por %p49, %p50
      %s53 = sadd.s32 %s52, 1
      %p56 = scmp.eq.s32.totalorder %s18, 1
      %p57 = scmp.ne.s32.totalorder %s52, %s54
      %p58 = scmp.eq.s32.totalorder %s18, 0
      %p59 = por %p57, %p58
      %p60 = scmp.ne.s32.totalorder %s52, %s54
      %p61 = scmp.eq.s32.totalorder %s23, 1
      %p62 = por %p60, %p61
      %p63 = scmp.ne.s32.totalorder %s54, %s55
      %p64 = scmp.eq.s32.totalorder %s23, 0
      %p65 = por %p63, %p64
      %p66 = scmp.ne.s32.totalorder %s54, %s55
      %p67 = scmp.eq.s32.totalorder %s24, 1
      %p68 = por %p66, %p67
      %p70 = scmp.ne.s32.totalorder %s55, %s69
      %p71 = scmp.eq.s32.totalorder %s24, 0
      %p72 = por %p70, %p71
      %s74 = sadd.s32 %s73, 1
      %p77 = scmp.eq.s32.totalorder %s18, 1
      %p78 = scmp.ne.s32.totalorder %s73, %s75
      %p79 = scmp.eq.s32.totalorder %s18, 0
      %p80 = por %p78, %p79
      %p81 = scmp.ne.s32.totalorder %s73, %s75
      %p82 = scmp.eq.s32.totalorder %s23, 1
      %p83 = por %p81, %p82
      %p84 = scmp.ne.s32.totalorder %s75, %s76
      %p85 = scmp.eq.s32.totalorder %s23, 0
      %p86 = por %p84, %p85
      %p87 = scmp.ne.s32.totalorder %s75, %s76
      %p88 = scmp.eq.s32.totalorder %s24, 1
      %p89 = por %p87, %p88
      %p91 = scmp.ne.s32.totalorder %s76, %s90
      %p92 = scmp.eq.s32.totalorder %s24, 0
      %p93 = por %p91, %p92
      %s95 = sadd.s32 %s94, 1
      %p98 = scmp.eq.s32.totalorder %s18, 1
      %p99 = scmp.ne.s32.totalorder %s94, %s96
      %p100 = scmp.eq.s32.totalorder %s18, 0
      %p101 = por %p99, %p100
      %p102 = scmp.ne.s32.totalorder %s94, %s96
      %p103 = scmp.eq.s32.totalorder %s23, 1
      %p104 = por %p102, %p103
      %p105 = scmp.ne.s32.totalorder %s96, %s97
      %p106 = scmp.eq.s32.totalorder %s23, 0
      %p107 = por %p105, %p106
      %p108 = scmp.ne.s32.totalorder %s96, %s97
      %p109 = scmp.eq.s32.totalorder %s24, 1
      %p110 = por %p108, %p109
      %p112 = scmp.ne.s32.totalorder %s97, %s111
      %p113 = scmp.eq.s32.totalorder %s24, 0
      %p114 = por %p112, %p113
      %s116 = sadd.s32 %s115, 1
      %p119 = scmp.eq.s32.totalorder %s18, 1
      %p120 = scmp.ne.s32.totalorder %s115, %s117
      %p121 = scmp.eq.s32.totalorder %s18, 0
      %p122 = por %p120, %p121
      %p123 = scmp.ne.s32.totalorder %s115, %s117
      %p124 = scmp.eq.s32.totalorder %s23, 1
      %p125 = por %p123, %p124
      %p126 = scmp.ne.s32.totalorder %s117, %s118
      %p127 = scmp.eq.s32.totalorder %s23, 0
      %p128 = por %p126, %p127
      %p129 = scmp.ne.s32.totalorder %s117, %s118
      %p130 = scmp.eq.s32.totalorder %s24, 1
      %p131 = por %p129, %p130
      %p133 = scmp.ne.s32.totalorder %s118, %s132
      %p134 = scmp.eq.s32.totalorder %s24, 0
      %p135 = por %p133, %p134
      %s137 = sadd.s32 %s136, 1
      %p140 = scmp.eq.s32.totalorder %s18, 1
      %p141 = scmp.ne.s32.totalorder %s136, %s138
      %p142 = scmp.eq.s32.totalorder %s18, 0
      %p143 = por %p141, %p142
      %p144 = scmp.ne.s32.totalorder %s136, %s138
      %p145 = scmp.eq.s32.totalorder %s23, 1
      %p146 = por %p144, %p145
      %p147 = scmp.ne.s32.totalorder %s138, %s139
      %p148 = scmp.eq.s32.totalorder %s23, 0
      %p149 = por %p147, %p148
      %p150 = scmp.ne.s32.totalorder %s138, %s139
      %p151 = scmp.eq.s32.totalorder %s24, 1
      %p152 = por %p150, %p151
      %p154 = scmp.ne.s32.totalorder %s139, %s153
      %p155 = scmp.eq.s32.totalorder %s24, 0
      %p156 = por %p154, %p155
      %s158 = sadd.s32 %s157, 1
      %p161 = scmp.eq.s32.totalorder %s18, 1
      %p162 = scmp.ne.s32.totalorder %s157, %s159
      %p163 = scmp.eq.s32.totalorder %s18, 0
      %p164 = por %p162, %p163
      %p165 = scmp.ne.s32.totalorder %s157, %s159
      %p166 = scmp.eq.s32.totalorder %s23, 1
      %p167 = por %p165, %p166
      %p168 = scmp.ne.s32.totalorder %s159, %s160
      %p169 = scmp.eq.s32.totalorder %s23, 0
      %p170 = por %p168, %p169
      %p171 = scmp.ne.s32.totalorder %s159, %s160
      %p172 = scmp.eq.s32.totalorder %s24, 1
      %p173 = por %p171, %p172
      %p175 = scmp.ne.s32.totalorder %s160, %s174
      %p176 = scmp.eq.s32.totalorder %s24, 0
      %p177 = por %p175, %p176
      %s178 = ssub.s32 %s18, %s25
      %p179 = scmp.eq.s32.totalorder %s178, 0
      %s181 = sadd.s32 %s180, 1
      %s182 = scalar_select %p179, %s180, %s181
      %p185 = pneg %p179
      %p186 = scmp.eq.s32.totalorder %s18, 1
      %p187 = por %p185, %p186
      %p188 = scmp.ne.s32.totalorder %s180, %s183
      %p189 = scmp.eq.s32.totalorder %s18, 0
      %p190 = por %p188, %p189
      %p191 = scmp.ne.s32.totalorder %s180, %s183
      %p192 = scmp.eq.s32.totalorder %s23, 1
      %p193 = por %p191, %p192
      %p194 = scmp.ne.s32.totalorder %s183, %s184
      %p195 = scmp.eq.s32.totalorder %s23, 0
      %p196 = por %p194, %p195
      %p197 = scmp.ne.s32.totalorder %s183, %s184
      %p198 = scmp.eq.s32.totalorder %s24, 1
      %p199 = por %p197, %p198
      %p201 = scmp.ne.s32.totalorder %s184, %s200
      %p202 = scmp.eq.s32.totalorder %s24, 0
      %p203 = por %p201, %p202
      %p204 = scmp.le.s32.totalorder 1, %s18
      %p205 = scmp.lt.s32.totalorder %s18, 3
      %p206 = pnand %p204, %p205
      %p207 = pneg %p206
      // Predicated region
      $region9: #{tpu_custom_call.1} parent=5 // pred_check
        _
      $region10: #{tpu_custom_call.1} parent=5 // pred_check_branch
        %209 = sbr.rel (%p206) target = $region12
      $region11: #{tpu_custom_call.1} parent=5 // pred_region
        %s210 = ssub.s32 %s18, 1
        // Predicated region
        $region13: #{tpu_custom_call.1} parent=11 // pred_check
          %p211 = pneg %p65
        $region14: #{tpu_custom_call.1} parent=11 // pred_check_branch
          %213 = sbr.rel (%p211) target = $region16
        $region15: #{tpu_custom_call.1} parent=11 // pred_region
          _
        $region16: #{tpu_custom_call.1} parent=11 // pred_fallthru
          _
        // Predicated region
        $region17: #{tpu_custom_call.1} parent=11 // pred_check
          %p214 = pneg %p86
        $region18: #{tpu_custom_call.1} parent=11 // pred_check_branch
          %216 = sbr.rel (%p214) target = $region20
        $region19: #{tpu_custom_call.1} parent=11 // pred_region
          _
        $region20: #{tpu_custom_call.1} parent=11 // pred_fallthru
          _
        // Predicated region
        $region21: #{tpu_custom_call.1} parent=11 // pred_check
          %p217 = pneg %p107
        $region22: #{tpu_custom_call.1} parent=11 // pred_check_branch
          %219 = sbr.rel (%p217) target = $region24
        $region23: #{tpu_custom_call.1} parent=11 // pred_region
          %s221 = ssub.s32 4096, 4096
          %222 = vsyncadd [#allocation3], %s221
          %s223 = sshll.u32 [#allocation2], 4
          %s224 = int_to_ptr.vmem [resolvable:$true] %s223
          %229 = dma.hbm_to_vmem [thread:$0]  %s3, 4096, %s224, [#allocation3], 128, 128, 8
        $region24: #{tpu_custom_call.1} parent=11 // pred_fallthru
          _
        // Predicated region
        $region25: #{tpu_custom_call.1} parent=11 // pred_check
          %p230 = pneg %p128
        $region26: #{tpu_custom_call.1} parent=11 // pred_check_branch
          %232 = sbr.rel (%p230) target = $region28
        $region27: #{tpu_custom_call.1} parent=11 // pred_region
          _
        $region28: #{tpu_custom_call.1} parent=11 // pred_fallthru
          _
        // Predicated region
        $region29: #{tpu_custom_call.1} parent=11 // pred_check
          %p233 = pneg %p149
        $region30: #{tpu_custom_call.1} parent=11 // pred_check_branch
          %235 = sbr.rel (%p233) target = $region32
        $region31: #{tpu_custom_call.1} parent=11 // pred_region
          %s237 = ssub.s32 2048, 2048
          %238 = vsyncadd [#allocation6], %s237
          %s239 = sshll.u32 [#allocation5], 4
          %s240 = int_to_ptr.vmem [resolvable:$true] %s239
          %245 = dma.hbm_to_vmem [thread:$0]  %s5, 2048, %s240, [#allocation6], 64, 64, 4
        $region32: #{tpu_custom_call.1} parent=11 // pred_fallthru
          _
        // Predicated region
        $region33: #{tpu_custom_call.1} parent=11 // pred_check
          %p246 = pneg %p170
        $region34: #{tpu_custom_call.1} parent=11 // pred_check_branch
          %248 = sbr.rel (%p246) target = $region36
        $region35: #{tpu_custom_call.1} parent=11 // pred_region
          _
        $region36: #{tpu_custom_call.1} parent=11 // pred_fallthru
          _
      $region12: #{tpu_custom_call.1} parent=5 // pred_fallthru
        _
      %p249 = scmp.lt.s32.totalorder %s18, 2
      // Predicated region
      $region37: #{tpu_custom_call.1} parent=5 // pred_check
        %p250 = pneg %p249
      $region38: #{tpu_custom_call.1} parent=5 // pred_check_branch
        %252 = sbr.rel (%p250) target = $region40
      $region39: #{tpu_custom_call.1} parent=5 // pred_region
        // Predicated region
        $region41: #{tpu_custom_call.1} parent=39 // pred_check
          %p253 = pneg %p38
        $region42: #{tpu_custom_call.1} parent=39 // pred_check_branch
          %255 = sbr.rel (%p253) target = $region44
        $region43: #{tpu_custom_call.1} parent=39 // pred_region
          %s256 = smul.u32 2, %s18
          %p257 = scmp.lt.s32.totalorder %s256, 3
          %s258 = scalar_select %p257, %s256, 3
          %s259 = smul.addr %s258, 8
          %s260 = scalar_lea.vmem %s0, %s259
          %s261 = smul.u32 2, %s18
        $region44: #{tpu_custom_call.1} parent=39 // pred_fallthru
          _
      $region40: #{tpu_custom_call.1} parent=5 // pred_fallthru
        _
      %p262 = scmp.le.s32.totalorder 1, %s18
      %p263 = scmp.lt.s32.totalorder %s18, 3
      %p264 = pnand %p262, %p263
      %p265 = pneg %p264
      // Predicated region
      $region45: #{tpu_custom_call.1} parent=5 // pred_check
        _
      $region46: #{tpu_custom_call.1} parent=5 // pred_check_branch
        %267 = sbr.rel (%p264) target = $region48
      $region47: #{tpu_custom_call.1} parent=5 // pred_region
        %s268 = ssub.s32 %s18, 1
        // Predicated region
        $region49: #{tpu_custom_call.1} parent=47 // pred_check
          %p269 = pneg %p107
        $region50: #{tpu_custom_call.1} parent=47 // pred_check_branch
          %271 = sbr.rel (%p269) target = $region52
        $region51: #{tpu_custom_call.1} parent=47 // pred_region
          %272 = dma.done [#allocation3], 4096
        $region52: #{tpu_custom_call.1} parent=47 // pred_fallthru
          _
        // Predicated region
        $region53: #{tpu_custom_call.1} parent=47 // pred_check
          %p273 = pneg %p149
        $region54: #{tpu_custom_call.1} parent=47 // pred_check_branch
          %275 = sbr.rel (%p273) target = $region56
        $region55: #{tpu_custom_call.1} parent=47 // pred_region
          %276 = dma.done [#allocation6], 2048
        $region56: #{tpu_custom_call.1} parent=47 // pred_fallthru
          _
        %s277 = smul.u32 2, %s23
        %p278 = scmp.lt.s32.totalorder %s277, 3
        %s279 = scalar_select %p278, %s277, 3
        %s280 = smul.addr %s279, 8
        %s281 = scalar_lea.vmem %s0, %s280
        %p282 = pneg %p44
        %p283 = pneg %p41
        %p284 = pneg %p65
        %p285 = pneg %p62
        %p286 = pneg %p86
        %p287 = pneg %p83
        %p288 = pneg %p107
        %p289 = pneg %p104
        %p290 = pneg %p128
        %p291 = pneg %p125
        %p292 = pneg %p149
        %p293 = pneg %p146
        %p294 = pneg %p170
        %p295 = pneg %p167
        %p296 = pneg %p196
        %p297 = pneg %p193
        %s298 = sand.u32 %s183, 1
        %s299 = scalar_lea.sflag [#allocation4], %s298
        %s300 = sand.u32 %s183, 1
        %s301 = smul.addr %s300, 8
        %s302 = scalar_lea.vmem [#allocation7], %s301
        %s303 = smul.u32 2, %s23
        %p304 = scmp.lt.s32.totalorder %s303, 3
        %s305 = scalar_select %p304, %s303, 3
        %s306 = smul.addr %s305, 8
        %s307 = scalar_lea.vmem %s0, %s306
        %s308 = smul.u32 2, %s23
        %s309 = smul.u32 2, %s23
        %v311 = vld [vmem:[%s307] sm:$0xff]
        %v312 = vld [vmem:[%s307 + $0x8] sm:$0xff]
        %v313 = vpack.c.bf16 %v312, %v311
        %v314 = vld [vmem:[%s1] sm:$0xff]
        %v315 = vld [vmem:[%s2] sm:$0x3]
        %v317 = vlaneseq
        %v318 = vshrl.u32 %v317, 7
        %v319 = vsub.s32 0, %v318
        %v320 = vrot.slane %v315, %v319
        %v321 = vlaneseq
        %v322 = vshrl.u32 %v321, 7
        %v323 = vsub.s32 1, %v322
        %v324 = vrot.slane %v315, %v323
        %v328 = vunpack.c.l.b16 %v314
        %v329 = vunpack.c.h.b16 %v314
        %v330 = vpack.c.b16 %v328, %v328
        %v331 = vpack.c.b16 %v329, %v329
        %vm332 = vcmask 64512
        %v334 = vsel %vm332, %v313, 0
        %vm336 = vcmask 1043456
        %v338 = vsel %vm336, %v330, 0
        %v341 = vsel %vm336, %v331, 0
        %343 = vmatprep.subr.bf16.mxu0 %v341
        %344 = vmatpush1.bf16.msra.mxu0 %v338
        %345 = vmatprep.subr.bf16.mxu0 0
        %346 = vmatpush1.bf16.msra.mxu0 0
        %347 = vmatprep.subr.bf16.mxu0 0
        %348 = vmatpush1.bf16.msra.mxu0 0
        %349 = vmatprep.subr.bf16.mxu0 0
        %350 = vmatpush1.bf16.msra.mxu0 0
        %351 = vmatprep.subr.bf16.mxu0 0
        %352 = vmatpush1.bf16.msra.mxu0 0
        %353 = vmatprep.subr.bf16.mxu0 0
        %354 = vmatpush1.bf16.msra.mxu0 0
        %355 = vmatprep.subr.bf16.mxu0 0
        %356 = vmatpush1.bf16.msra.mxu0 0
        %357 = vmatprep.subr.bf16.mxu0 0
        %358 = vmatpush1.bf16.msra.mxu0 0
        %359 = vmatprep.subr.bf16.mxu0 0
        %360 = vmatpush1.bf16.msra.mxu0 0
        %361 = vmatprep.subr.bf16.mxu0 0
        %362 = vmatpush1.bf16.msra.mxu0 0
        %363 = vmatprep.subr.bf16.mxu0 0
        %364 = vmatpush1.bf16.msra.mxu0 0
        %365 = vmatprep.subr.bf16.mxu0 0
        %366 = vmatpush1.bf16.msra.mxu0 0
        %367 = vmatprep.subr.bf16.mxu0 0
        %368 = vmatpush1.bf16.msra.mxu0 0
        %369 = vmatprep.subr.bf16.mxu0 0
        %370 = vmatpush1.bf16.msra.mxu0 0
        %371 = vmatprep.subr.bf16.mxu0 0
        %372 = vmatpush1.bf16.msra.mxu0 0
        %373 = vmatprep.subr.bf16.mxu0 0
        %374 = vmatpush1.bf16.msra.mxu0 0
        %375 = vmatprep.mubr.bf16.mxu0 0
        %376 = vmatmul.mubr.bf16.gmra.mrb[0].mxu0 %v334
        %v377 = vpop.f32.mrb[0].mxu0
        %v378 = vadd.f32 %v320, %v377
        %v379 = vpop.f32.mrb[0].mxu0
        %v380 = vadd.f32 %v324, %v379
        %v381 = vpop.f32.mrb[0].mxu0
        %v382 = vadd.f32 %v320, %v381
        %v383 = vpop.f32.mrb[0].mxu0
        %v384 = vadd.f32 %v324, %v383
        %385 = vdwg.mxu0
        %v386 = vmax.f32 %v378, 0.0
        %v387 = vmax.f32 %v380, 0.0
        %v388 = vmax.f32 %v382, 0.0
        %v389 = vmax.f32 %v384, 0.0
        %v390 = vpack.c.bf16 %v388, %v386
        %v391 = vpack.c.bf16 %v389, %v387
        %v392 = vld [vmem:[#allocation2] sm:$0xff]
        %v393 = vld [vmem:[#allocation2 + $0x8] sm:$0xff]
        %v394 = vld [vmem:[#allocation2 + $0x10] sm:$0xff]
        %v395 = vld [vmem:[#allocation2 + $0x18] sm:$0xff]
        %v396 = vld [vmem:[#allocation2 + $0x20] sm:$0xff]
        %v397 = vld [vmem:[#allocation2 + $0x28] sm:$0xff]
        %v398 = vld [vmem:[#allocation2 + $0x30] sm:$0xff]
        %v399 = vld [vmem:[#allocation2 + $0x38] sm:$0xff]
        %v400 = vld [vmem:[#allocation2 + $0x40] sm:$0xff]
        %v401 = vld [vmem:[#allocation2 + $0x48] sm:$0xff]
        %v402 = vld [vmem:[#allocation2 + $0x50] sm:$0xff]
        %v403 = vld [vmem:[#allocation2 + $0x58] sm:$0xff]
        %v404 = vld [vmem:[#allocation2 + $0x60] sm:$0xff]
        %v405 = vld [vmem:[#allocation2 + $0x68] sm:$0xff]
        %v406 = vld [vmem:[#allocation2 + $0x70] sm:$0xff]
        %v407 = vld [vmem:[#allocation2 + $0x78] sm:$0xff]
        %v408 = vld [vmem:[#allocation2 + $0x80] sm:$0xff]
        %v409 = vld [vmem:[#allocation2 + $0x88] sm:$0xff]
        %v410 = vld [vmem:[#allocation2 + $0x90] sm:$0xff]
        %v411 = vld [vmem:[#allocation2 + $0x98] sm:$0xff]
        %v412 = vld [vmem:[#allocation2 + $0xa0] sm:$0xff]
        %v413 = vld [vmem:[#allocation2 + $0xa8] sm:$0xff]
        %v414 = vld [vmem:[#allocation2 + $0xb0] sm:$0xff]
        %v415 = vld [vmem:[#allocation2 + $0xb8] sm:$0xff]
        %v416 = vld [vmem:[#allocation2 + $0xc0] sm:$0xff]
        %v417 = vld [vmem:[#allocation2 + $0xc8] sm:$0xff]
        %v418 = vld [vmem:[#allocation2 + $0xd0] sm:$0xff]
        %v419 = vld [vmem:[#allocation2 + $0xd8] sm:$0xff]
        %v420 = vld [vmem:[#allocation2 + $0xe0] sm:$0xff]
        %v421 = vld [vmem:[#allocation2 + $0xe8] sm:$0xff]
        %v422 = vld [vmem:[#allocation2 + $0xf0] sm:$0xff]
        %v423 = vld [vmem:[#allocation2 + $0xf8] sm:$0xff]
        %v424 = vld [vmem:[%s4] sm:$0x3]
        %v426 = vlaneseq
        %v427 = vshrl.u32 %v426, 7
        %v428 = vsub.s32 0, %v427
        %v429 = vrot.slane %v424, %v428
        %v430 = vlaneseq
        %v431 = vshrl.u32 %v430, 7
        %v432 = vsub.s32 1, %v431
        %v433 = vrot.slane %v424, %v432
        %v468 = vunpack.c.l.b16 %v392
        %v469 = vunpack.c.h.b16 %v392
        %v470 = vunpack.c.l.b16 %v393
        %v471 = vunpack.c.h.b16 %v393
        %v472 = vunpack.c.l.b16 %v394
        %v473 = vunpack.c.h.b16 %v394
        %v474 = vunpack.c.l.b16 %v395
        %v475 = vunpack.c.h.b16 %v395
        %v476 = vunpack.c.l.b16 %v396
        %v477 = vunpack.c.h.b16 %v396
        %v478 = vunpack.c.l.b16 %v397
        %v479 = vunpack.c.h.b16 %v397
        %v480 = vunpack.c.l.b16 %v398
        %v481 = vunpack.c.h.b16 %v398
        %v482 = vunpack.c.l.b16 %v399
        %v483 = vunpack.c.h.b16 %v399
        %v484 = vunpack.c.l.b16 %v400
        %v485 = vunpack.c.h.b16 %v400
        %v486 = vunpack.c.l.b16 %v401
        %v487 = vunpack.c.h.b16 %v401
        %v488 = vunpack.c.l.b16 %v402
        %v489 = vunpack.c.h.b16 %v402
        %v490 = vunpack.c.l.b16 %v403
        %v491 = vunpack.c.h.b16 %v403
        %v492 = vunpack.c.l.b16 %v404
        %v493 = vunpack.c.h.b16 %v404
        %v494 = vunpack.c.l.b16 %v405
        %v495 = vunpack.c.h.b16 %v405
        %v496 = vunpack.c.l.b16 %v406
        %v497 = vunpack.c.h.b16 %v406
        %v498 = vunpack.c.l.b16 %v407
        %v499 = vunpack.c.h.b16 %v407
        %v500 = vunpack.c.l.b16 %v408
        %v501 = vunpack.c.h.b16 %v408
        %v502 = vunpack.c.l.b16 %v409
        %v503 = vunpack.c.h.b16 %v409
        %v504 = vunpack.c.l.b16 %v410
        %v505 = vunpack.c.h.b16 %v410
        %v506 = vunpack.c.l.b16 %v411
        %v507 = vunpack.c.h.b16 %v411
        %v508 = vunpack.c.l.b16 %v412
        %v509 = vunpack.c.h.b16 %v412
        %v510 = vunpack.c.l.b16 %v413
        %v511 = vunpack.c.h.b16 %v413
        %v512 = vunpack.c.l.b16 %v414
        %v513 = vunpack.c.h.b16 %v414
        %v514 = vunpack.c.l.b16 %v415
        %v515 = vunpack.c.h.b16 %v415
        %v516 = vunpack.c.l.b16 %v416
        %v517 = vunpack.c.h.b16 %v416
        %v518 = vunpack.c.l.b16 %v417
        %v519 = vunpack.c.h.b16 %v417
        %v520 = vunpack.c.l.b16 %v418
        %v521 = vunpack.c.h.b16 %v418
        %v522 = vunpack.c.l.b16 %v419
        %v523 = vunpack.c.h.b16 %v419
        %v524 = vunpack.c.l.b16 %v420
        %v525 = vunpack.c.h.b16 %v420
        %v526 = vunpack.c.l.b16 %v421
        %v527 = vunpack.c.h.b16 %v421
        %v528 = vunpack.c.l.b16 %v422
        %v529 = vunpack.c.h.b16 %v422
        %v530 = vunpack.c.l.b16 %v423
        %v531 = vunpack.c.h.b16 %v423
        %v532 = vpack.c.b16 %v470, %v468
        %v533 = vpack.c.b16 %v471, %v469
        %v534 = vpack.c.b16 %v474, %v472
        %v535 = vpack.c.b16 %v475, %v473
        %v536 = vpack.c.b16 %v478, %v476
        %v537 = vpack.c.b16 %v479, %v477
        %v538 = vpack.c.b16 %v482, %v480
        %v539 = vpack.c.b16 %v483, %v481
        %v540 = vpack.c.b16 %v486, %v484
        %v541 = vpack.c.b16 %v487, %v485
        %v542 = vpack.c.b16 %v490, %v488
        %v543 = vpack.c.b16 %v491, %v489
        %v544 = vpack.c.b16 %v494, %v492
        %v545 = vpack.c.b16 %v495, %v493
        %v546 = vpack.c.b16 %v498, %v496
        %v547 = vpack.c.b16 %v499, %v497
        %v548 = vpack.c.b16 %v502, %v500
        %v549 = vpack.c.b16 %v503, %v501
        %v550 = vpack.c.b16 %v506, %v504
        %v551 = vpack.c.b16 %v507, %v505
        %v552 = vpack.c.b16 %v510, %v508
        %v553 = vpack.c.b16 %v511, %v509
        %v554 = vpack.c.b16 %v514, %v512
        %v555 = vpack.c.b16 %v515, %v513
        %v556 = vpack.c.b16 %v518, %v516
        %v557 = vpack.c.b16 %v519, %v517
        %v558 = vpack.c.b16 %v522, %v520
        %v559 = vpack.c.b16 %v523, %v521
        %v560 = vpack.c.b16 %v526, %v524
        %v561 = vpack.c.b16 %v527, %v525
        %v562 = vpack.c.b16 %v530, %v528
        %v563 = vpack.c.b16 %v531, %v529
        %596 = vmatprep.subr.bf16.mxu0 %v533
        %597 = vmatpush1.bf16.msra.mxu0 %v532
        %598 = vmatprep.subr.bf16.mxu0 %v535
        %599 = vmatpush1.bf16.msra.mxu0 %v534
        %600 = vmatprep.subr.bf16.mxu0 %v537
        %601 = vmatpush1.bf16.msra.mxu0 %v536
        %602 = vmatprep.subr.bf16.mxu0 %v539
        %603 = vmatpush1.bf16.msra.mxu0 %v538
        %604 = vmatprep.subr.bf16.mxu0 %v541
        %605 = vmatpush1.bf16.msra.mxu0 %v540
        %606 = vmatprep.subr.bf16.mxu0 %v543
        %607 = vmatpush1.bf16.msra.mxu0 %v542
        %608 = vmatprep.subr.bf16.mxu0 %v545
        %609 = vmatpush1.bf16.msra.mxu0 %v544
        %610 = vmatprep.subr.bf16.mxu0 %v547
        %611 = vmatpush1.bf16.msra.mxu0 %v546
        %612 = vmatprep.subr.bf16.mxu0 %v549
        %613 = vmatpush1.bf16.msra.mxu0 %v548
        %614 = vmatprep.subr.bf16.mxu0 %v551
        %615 = vmatpush1.bf16.msra.mxu0 %v550
        %616 = vmatprep.subr.bf16.mxu0 %v553
        %617 = vmatpush1.bf16.msra.mxu0 %v552
        %618 = vmatprep.subr.bf16.mxu0 %v555
        %619 = vmatpush1.bf16.msra.mxu0 %v554
        %620 = vmatprep.subr.bf16.mxu0 %v557
        %621 = vmatpush1.bf16.msra.mxu0 %v556
        %622 = vmatprep.subr.bf16.mxu0 %v559
        %623 = vmatpush1.bf16.msra.mxu0 %v558
        %624 = vmatprep.subr.bf16.mxu0 %v561
        %625 = vmatpush1.bf16.msra.mxu0 %v560
        %626 = vmatprep.subr.bf16.mxu0 %v563
        %627 = vmatpush1.bf16.msra.mxu0 %v562
        %628 = vmatprep.mubr.bf16.mxu0 %v391
        %629 = vmatmul.mubr.bf16.gmra.mrb[0].mxu0 %v390
        %v630 = vpop.f32.mrb[0].mxu0
        %v631 = vadd.f32 %v429, %v630
        %v632 = vpop.f32.mrb[0].mxu0
        %v633 = vadd.f32 %v433, %v632
        %v634 = vpop.f32.mrb[0].mxu0
        %v635 = vadd.f32 %v429, %v634
        %v636 = vpop.f32.mrb[0].mxu0
        %v637 = vadd.f32 %v433, %v636
        %638 = vdwg.mxu0
        %v639 = vmax.f32 %v631, 0.0
        %v640 = vmax.f32 %v633, 0.0
        %v641 = vmax.f32 %v635, 0.0
        %v642 = vmax.f32 %v637, 0.0
        %v643 = vpack.c.bf16 %v641, %v639
        %v644 = vpack.c.bf16 %v642, %v640
        %v645 = vld [vmem:[#allocation5] sm:$0xf]
        %v646 = vld [vmem:[#allocation5 + $0x4] sm:$0xf]
        %v647 = vld [vmem:[#allocation5 + $0x8] sm:$0xf]
        %v648 = vld [vmem:[#allocation5 + $0xc] sm:$0xf]
        %v649 = vld [vmem:[#allocation5 + $0x10] sm:$0xf]
        %v650 = vld [vmem:[#allocation5 + $0x14] sm:$0xf]
        %v651 = vld [vmem:[#allocation5 + $0x18] sm:$0xf]
        %v652 = vld [vmem:[#allocation5 + $0x1c] sm:$0xf]
        %v653 = vld [vmem:[#allocation5 + $0x20] sm:$0xf]
        %v654 = vld [vmem:[#allocation5 + $0x24] sm:$0xf]
        %v655 = vld [vmem:[#allocation5 + $0x28] sm:$0xf]
        %v656 = vld [vmem:[#allocation5 + $0x2c] sm:$0xf]
        %v657 = vld [vmem:[#allocation5 + $0x30] sm:$0xf]
        %v658 = vld [vmem:[#allocation5 + $0x34] sm:$0xf]
        %v659 = vld [vmem:[#allocation5 + $0x38] sm:$0xf]
        %v660 = vld [vmem:[#allocation5 + $0x3c] sm:$0xf]
        %v661 = vld [vmem:[#allocation5 + $0x40] sm:$0xf]
        %v662 = vld [vmem:[#allocation5 + $0x44] sm:$0xf]
        %v663 = vld [vmem:[#allocation5 + $0x48] sm:$0xf]
        %v664 = vld [vmem:[#allocation5 + $0x4c] sm:$0xf]
        %v665 = vld [vmem:[#allocation5 + $0x50] sm:$0xf]
        %v666 = vld [vmem:[#allocation5 + $0x54] sm:$0xf]
        %v667 = vld [vmem:[#allocation5 + $0x58] sm:$0xf]
        %v668 = vld [vmem:[#allocation5 + $0x5c] sm:$0xf]
        %v669 = vld [vmem:[#allocation5 + $0x60] sm:$0xf]
        %v670 = vld [vmem:[#allocation5 + $0x64] sm:$0xf]
        %v671 = vld [vmem:[#allocation5 + $0x68] sm:$0xf]
        %v672 = vld [vmem:[#allocation5 + $0x6c] sm:$0xf]
        %v673 = vld [vmem:[#allocation5 + $0x70] sm:$0xf]
        %v674 = vld [vmem:[#allocation5 + $0x74] sm:$0xf]
        %v675 = vld [vmem:[#allocation5 + $0x78] sm:$0xf]
        %v676 = vld [vmem:[#allocation5 + $0x7c] sm:$0xf]
        %v677 = vld [vmem:[%s6] sm:$0x1]
        %v679 = vlaneseq
        %v680 = vshrl.u32 %v679, 7
        %v681 = vsub.s32 0, %v680
        %v682 = vrot.slane %v677, %v681
        %v716 = vunpack.c.l.b16 %v645
        %v717 = vunpack.c.l.b16 %v646
        %v718 = vunpack.c.l.b16 %v647
        %v719 = vunpack.c.l.b16 %v648
        %v720 = vunpack.c.l.b16 %v649
        %v721 = vunpack.c.l.b16 %v650
        %v722 = vunpack.c.l.b16 %v651
        %v723 = vunpack.c.l.b16 %v652
        %v724 = vunpack.c.l.b16 %v653
        %v725 = vunpack.c.l.b16 %v654
        %v726 = vunpack.c.l.b16 %v655
        %v727 = vunpack.c.l.b16 %v656
        %v728 = vunpack.c.l.b16 %v657
        %v729 = vunpack.c.l.b16 %v658
        %v730 = vunpack.c.l.b16 %v659
        %v731 = vunpack.c.l.b16 %v660
        %v732 = vunpack.c.l.b16 %v661
        %v733 = vunpack.c.l.b16 %v662
        %v734 = vunpack.c.l.b16 %v663
        %v735 = vunpack.c.l.b16 %v664
        %v736 = vunpack.c.l.b16 %v665
        %v737 = vunpack.c.l.b16 %v666
        %v738 = vunpack.c.l.b16 %v667
        %v739 = vunpack.c.l.b16 %v668
        %v740 = vunpack.c.l.b16 %v669
        %v741 = vunpack.c.l.b16 %v670
        %v742 = vunpack.c.l.b16 %v671
        %v743 = vunpack.c.l.b16 %v672
        %v744 = vunpack.c.l.b16 %v673
        %v745 = vunpack.c.l.b16 %v674
        %v746 = vunpack.c.l.b16 %v675
        %v747 = vunpack.c.l.b16 %v676
        %v748 = vpack.c.b16 %v717, %v716
        %v749 = vpack.c.b16 %v719, %v718
        %v750 = vpack.c.b16 %v721, %v720
        %v751 = vpack.c.b16 %v723, %v722
        %v752 = vpack.c.b16 %v725, %v724
        %v753 = vpack.c.b16 %v727, %v726
        %v754 = vpack.c.b16 %v729, %v728
        %v755 = vpack.c.b16 %v731, %v730
        %v756 = vpack.c.b16 %v733, %v732
        %v757 = vpack.c.b16 %v735, %v734
        %v758 = vpack.c.b16 %v737, %v736
        %v759 = vpack.c.b16 %v739, %v738
        %v760 = vpack.c.b16 %v741, %v740
        %v761 = vpack.c.b16 %v743, %v742
        %v762 = vpack.c.b16 %v745, %v744
        %v763 = vpack.c.b16 %v747, %v746
        %780 = vmatprep.subr.bf16.mxu0 0
        %781 = vmatpush1.bf16.msra.mxu0 %v748
        %782 = vmatprep.subr.bf16.mxu0 0
        %783 = vmatpush1.bf16.msra.mxu0 %v749
        %784 = vmatprep.subr.bf16.mxu0 0
        %785 = vmatpush1.bf16.msra.mxu0 %v750
        %786 = vmatprep.subr.bf16.mxu0 0
        %787 = vmatpush1.bf16.msra.mxu0 %v751
        %788 = vmatprep.subr.bf16.mxu0 0
        %789 = vmatpush1.bf16.msra.mxu0 %v752
        %790 = vmatprep.subr.bf16.mxu0 0
        %791 = vmatpush1.bf16.msra.mxu0 %v753
        %792 = vmatprep.subr.bf16.mxu0 0
        %793 = vmatpush1.bf16.msra.mxu0 %v754
        %794 = vmatprep.subr.bf16.mxu0 0
        %795 = vmatpush1.bf16.msra.mxu0 %v755
        %796 = vmatprep.subr.bf16.mxu0 0
        %797 = vmatpush1.bf16.msra.mxu0 %v756
        %798 = vmatprep.subr.bf16.mxu0 0
        %799 = vmatpush1.bf16.msra.mxu0 %v757
        %800 = vmatprep.subr.bf16.mxu0 0
        %801 = vmatpush1.bf16.msra.mxu0 %v758
        %802 = vmatprep.subr.bf16.mxu0 0
        %803 = vmatpush1.bf16.msra.mxu0 %v759
        %804 = vmatprep.subr.bf16.mxu0 0
        %805 = vmatpush1.bf16.msra.mxu0 %v760
        %806 = vmatprep.subr.bf16.mxu0 0
        %807 = vmatpush1.bf16.msra.mxu0 %v761
        %808 = vmatprep.subr.bf16.mxu0 0
        %809 = vmatpush1.bf16.msra.mxu0 %v762
        %810 = vmatprep.subr.bf16.mxu0 0
        %811 = vmatpush1.bf16.msra.mxu0 %v763
        %812 = vmatprep.mubr.bf16.mxu0 %v644
        %813 = vmatmul.mubr.bf16.gmra.mrb[0].mxu0 %v643
        %v814 = vpop.f32.mrb[0].mxu0
        %v815 = vadd.f32 %v682, %v814
        %v816 = vpop.f32.mrb[0].mxu0
        %v817 = vpop.f32.mrb[0].mxu0
        %v818 = vadd.f32 %v682, %v817
        %v819 = vpop.f32.mrb[0].mxu0
        %820 = vdwg.mxu0
        %v821 = vpack.c.bf16 %v818, %v815
        %v823 = vunpack.c.l.b16 %v821
        %v824 = vunpack.c.h.b16 %v821
        %v825 = vpack.c.b16 %v823, %v823
        %v826 = vpack.c.b16 %v824, %v824
        %829 = vst [vmem:[%s302] sm:$0xf] %v825
        %830 = vst [vmem:[%s302 + $0x4] sm:$0xf] %v826
        %s831 = sand.u32 %s183, 1
        %s832 = scalar_lea.sflag [#allocation4], %s831
        %s833 = sand.u32 %s183, 1
        %s834 = smul.addr %s833, 8
        %s835 = scalar_lea.vmem [#allocation7], %s834
        // Predicated region
        $region57: #{tpu_custom_call.1} parent=47 // pred_check
          %p836 = pneg %p193
        $region58: #{tpu_custom_call.1} parent=47 // pred_check_branch
          %838 = sbr.rel (%p836) target = $region60
        $region59: #{tpu_custom_call.1} parent=47 // pred_region
          %s839 = smul.u32 2, %s23
          %s841 = ssub.s32 128, 128
          %842 = vsyncadd %s832, %s841
          %s843 = smul.addr %s839, 64
          %s844 = scalar_lea.hbm %s7, %s843
          %s845 = sshll.u32 %s835, 4
          %s846 = int_to_ptr.vmem [resolvable:$true] %s845
          %851 = dma.vmem_to_hbm [thread:$0]  %s846, 128, %s844, %s832, 64, 64, 4
        $region60: #{tpu_custom_call.1} parent=47 // pred_fallthru
          _
      $region48: #{tpu_custom_call.1} parent=5 // pred_fallthru
        _
      %p852 = scmp.le.s32.totalorder 2, %s18
      // Predicated region
      $region61: #{tpu_custom_call.1} parent=5 // pred_check
        %p853 = pneg %p852
      $region62: #{tpu_custom_call.1} parent=5 // pred_check_branch
        %855 = sbr.rel (%p853) target = $region64
      $region63: #{tpu_custom_call.1} parent=5 // pred_region
        %s856 = ssub.s32 %s18, 2
        // Predicated region
        $region65: #{tpu_custom_call.1} parent=63 // pred_check
          %p857 = pneg %p199
        $region66: #{tpu_custom_call.1} parent=63 // pred_check_branch
          %859 = sbr.rel (%p857) target = $region68
        $region67: #{tpu_custom_call.1} parent=63 // pred_region
          %s860 = sand.u32 %s184, 1
          %s861 = scalar_lea.sflag [#allocation4], %s860
          %s862 = sand.u32 %s184, 1
          %s863 = smul.addr %s862, 8
          %s864 = scalar_lea.vmem [#allocation7], %s863
          %865 = dma.done %s861, 128
        $region68: #{tpu_custom_call.1} parent=63 // pred_fallthru
          _
      $region64: #{tpu_custom_call.1} parent=5 // pred_fallthru
        _
    $region6: #{tpu_custom_call.1} parent=1 // loop_footer
      %s22 = sadd.s32 1, %s18
    $region7: #{tpu_custom_call.1} parent=1 // loop_footer_branch
      %17 = sbr.rel target = $region3
    $region8: #{tpu_custom_call.1} parent=1 // loop_exit
      _
    %866 = vsyncpa [#allocation3], 1
    %s867 = scalar_lea.sflag [#allocation3], 1
    %868 = vsyncpa %s867, 1
    %869 = vsyncpa [#allocation6], 1
    %870 = vsyncpa [#allocation4], 1
    %s871 = scalar_lea.sflag [#allocation4], 1
    %872 = vsyncpa %s871, 1

</llo_original>
